<compile_context>
chip_gen: v5e
topology: v5e:2x2
jax: 0.10.0
libtpu: 0.0.40
codegen_flags: <defaults>
</compile_context>

<pallas_src>
import functools

import jax
import jax.numpy as jnp
from jax.experimental import pallas as pl
from jax.experimental.pallas import tpu as pltpu


# --------------------------------------------------------------------------- #
# Kernels
# --------------------------------------------------------------------------- #
def _conv_stats_kernel(x_ref, w_ref, y_ref, stats_ref, rhs_ref, *, offsets, hw):
    """ReLU + fused (dilated conv . 1x1 conv) for a block of images + partial BN stats.

    x_ref:     [B, R, L]        pre-shifted channel-major input rows (see wrapper).
    w_ref:     [C_out, n*R]     fused conv1.conv2 weight (row order matches RHS).
    y_ref:     [B, C_out, HW]   conv output, lane-dense (HW on lanes).
    stats_ref: [1, C_out, 2]    per-block partial (sum, sumsq) over (B, HW).
    rhs_ref:   [n*R, HW]        VMEM scratch used to assemble the matmul RHS.
    """
    n_img = x_ref.shape[0]
    rows = x_ref.shape[1]
    c_out = w_ref.shape[0]

    psum = jnp.zeros((c_out, 1), jnp.float32)
    psq = jnp.zeros((c_out, 1), jnp.float32)

    for b in range(n_img):                                   # static unroll (small B)
        if len(offsets) == 1:
            # Single contiguous slice already holds all K*K*C_in contraction rows.
            rhs = jnp.maximum(
                x_ref[b, :, pl.ds(offsets[0], hw)].astype(jnp.float32), 0.0)
        else:
            # Assemble [K*K*C_in, HW] RHS through VMEM (no in-kernel reshape): each
            # kh tap is one contiguous [K*C_in, HW] slice of the flattened input.
            for t, off in enumerate(offsets):
                rhs_ref[t * rows:(t + 1) * rows, :] = jnp.maximum(
                    x_ref[b, :, pl.ds(off, hw)].astype(jnp.float32), 0.0)
            rhs = rhs_ref[...]

        # One MXU push: [C_out, K*K*C_in] x [K*K*C_in, HW] -> [C_out, HW].
        y = jnp.dot(w_ref[...], rhs, preferred_element_type=jnp.float32)
        y_ref[b] = y.astype(y_ref.dtype)

        # BN partials: lane-axis reduces over [C_out, HW].
        psum = psum + jnp.sum(y, axis=1, keepdims=True)
        psq = psq + jnp.sum(y * y, axis=1, keepdims=True)

    stats_ref[0, :, 0:1] = psum
    stats_ref[0, :, 1:2] = psq


def _bn_apply_kernel(y_ref, a_ref, b_ref, o_ref):
    """Pure elementwise folded BatchNorm: out = y * scale + shift (lane-dense)."""
    o_ref[...] = (y_ref[...] * a_ref[...] + b_ref[...]).astype(o_ref.dtype)


# --------------------------------------------------------------------------- #
# Host-side helpers
# --------------------------------------------------------------------------- #
def _round_up(v, m):
    return -(-v // m) * m


def _tile_bytes(shape, itemsize=4):
    """Bytes of one VMEM block after (8, 128) tile padding of the last two dims."""
    s = list(shape)
    if len(s) >= 2:
        s[-2] = _round_up(s[-2], 8)
        s[-1] = _round_up(s[-1], 128)
    elif len(s) == 1:
        s[-1] = _round_up(s[-1], 128)
    n = itemsize
    for d in s:
        n *= d
    return n


def _pick_image_block(n, per_image_bytes, max_unroll=8, target_bytes=2 << 20):
    """Largest divisor-of-N image block that keeps blocks modest, the static per-image
    unroll bounded, and >= 2 grid blocks (both v7x TensorCores get work)."""
    best = 1
    for cand in range(1, min(n, max_unroll) + 1):
        if n % cand:
            continue
        if cand * per_image_bytes > target_bytes:
            break
        if n >= 2 and n // cand < 2:
            break
        best = cand
    return best


# --------------------------------------------------------------------------- #
# DilConv forward
# --------------------------------------------------------------------------- #
def dil_conv(x, w_dil, w_pw, gamma, beta, *, stride, padding, dilation, eps=1e-5):
    """x: [N, C_in, H, W] f32 (NCHW). Returns [N, C_out, H_out, W_out] f32."""
    N, C_in, H, W = x.shape
    C_out = w_pw.shape[0]
    K = w_dil.shape[2]
    H_out = (H + 2 * padding - dilation * (K - 1) - 1) // stride + 1
    W_out = (W + 2 * padding - dilation * (K - 1) - 1) // stride + 1
    HW = H_out * W_out
    KKC = K * K * C_in

    # ---- host glue: padded input, fused channel-major weight -----------------
    xf = x.astype(jnp.float32)
    xp = jnp.pad(xf, ((0, 0), (0, 0), (padding, padding), (padding, padding)))
    Hp = H + 2 * padding

    # w_dil (OIHW [C_mid, C_in, K, K]) and w_pw ([C_out, C_mid, 1, 1]) fold into one
    # weight (no nonlinearity between the convs), laid out [C_out, (kh, kw, ci)].
    w1 = jnp.transpose(w_dil, (2, 3, 1, 0)).reshape(KKC, w_dil.shape[0])
    w2 = jnp.transpose(w_pw[:, :, 0, 0], (1, 0))
    wT = jnp.transpose(
        jnp.matmul(w1, w2, precision=jax.lax.Precision.HIGHEST), (1, 0)
    ).astype(jnp.float32)                                     # [C_out, KKC]
    # TODO(synk): cast xw/wT to bfloat16 (keep f32 accumulators/stats) once shapes
    # become HBM-bound; kept f32 here for a tight match vs. the f32 reference.

    if stride == 1:
        # kw-shifted copies stacked into the row axis -> each kh tap is ONE
        # contiguous rank-2 [K*C_in, HW] slice of the flattened (Hp, W_out) axis.
        cols = [xp[:, :, :, kw * dilation: kw * dilation + W_out] for kw in range(K)]
        xw = jnp.stack(cols, axis=1).reshape(N, K * C_in, Hp * W_out)
        offsets = tuple(kh * dilation * W_out for kh in range(K))
        R, L = K * C_in, Hp * W_out
    else:
        # TODO(synk): stride>1 uses a host-side tap stack (~K^2/stride^2 x input
        # bytes) so every in-kernel slice stays rank-2 (no strided value slices /
        # in-kernel reshapes); revisit with pl.ds(stride=...) if traffic matters.
        wins = []
        for kh in range(K):
            for kw in range(K):
                h0, w0 = kh * dilation, kw * dilation
                wins.append(xp[:, :, h0:h0 + (H_out - 1) * stride + 1:stride,
                               w0:w0 + (W_out - 1) * stride + 1:stride])
        xw = jnp.stack(wins, axis=1).reshape(N, KKC, HW)
        offsets = (0,)
        R, L = KKC, HW

    B = _pick_image_block(N, _tile_bytes((1, R, L)))
    nblk = N // B

    x_spec = pl.BlockSpec((B, R, L), lambda i: (i, 0, 0))
    w_spec = pl.BlockSpec((C_out, KKC), lambda i: (0, 0))
    y_spec = pl.BlockSpec((B, C_out, HW), lambda i: (i, 0, 0))
    st_spec = pl.BlockSpec((1, C_out, 2), lambda i: (i, 0, 0))
    ab_spec = pl.BlockSpec((C_out, 1), lambda i: (0, 0))

    # Right-sized VMEM budgets (double-buffered blocks + weights + scratch + margin),
    # clamped to 48 MiB to stay inside v7x's 64 MiB VMEM.
    vmem1 = (2 * _tile_bytes((B, R, L)) + 2 * _tile_bytes((B, C_out, HW))
             + 2 * _tile_bytes((1, C_out, 2)) + _tile_bytes((C_out, KKC))
             + _tile_bytes((KKC, HW)) + (1 << 20))
    vmem2 = (4 * _tile_bytes((B, C_out, HW)) + 4 * _tile_bytes((C_out, 1)) + (1 << 20))
    cp1 = pltpu.CompilerParams(dimension_semantics=("parallel",),
                               vmem_limit_bytes=int(min(max(vmem1, 2 << 20), 48 << 20)))
    cp2 = pltpu.CompilerParams(dimension_semantics=("parallel",),
                               vmem_limit_bytes=int(min(max(vmem2, 2 << 20), 48 << 20)))

    # ---- pass 1: conv once, lane-dense y to HBM + per-block partial BN stats ----
    y, stats = pl.pallas_call(
        functools.partial(_conv_stats_kernel, offsets=offsets, hw=HW),
        out_shape=(jax.ShapeDtypeStruct((N, C_out, HW), jnp.float32),
                   jax.ShapeDtypeStruct((nblk, C_out, 2), jnp.float32)),
        grid_spec=pltpu.PrefetchScalarGridSpec(
            num_scalar_prefetch=0, grid=(nblk,),
            in_specs=[x_spec, w_spec],
            out_specs=[y_spec, st_spec],
            scratch_shapes=[pltpu.VMEM((KKC, HW), jnp.float32)]),
        compiler_params=cp1,
    )(xw, wT)

    # ---- BatchNorm2d, training-mode semantics (batch stats, biased variance) ----
    cnt = float(N * HW)
    ssum = jnp.sum(stats[:, :, 0], axis=0)
    ssq = jnp.sum(stats[:, :, 1], axis=0)
    mean = ssum / cnt
    var = jnp.maximum(ssq / cnt - mean * mean, 0.0)           # clamp: f32 cancellation
    scale = gamma.astype(jnp.float32) * jax.lax.rsqrt(var + eps)
    shift = beta.astype(jnp.float32) - mean * scale
    a2 = scale[:, None]                                       # [C_out, 1]
    b2 = shift[:, None]                                       # [C_out, 1]

    # ---- pass 2: pure elementwise folded BN (no recompute, no x/w re-read) ------
    out = pl.pallas_call(
        _bn_apply_kernel,
        out_shape=jax.ShapeDtypeStruct((N, C_out, HW), jnp.float32),
        grid_spec=pltpu.PrefetchScalarGridSpec(
            num_scalar_prefetch=0, grid=(nblk,),
            in_specs=[y_spec, ab_spec, ab_spec],
            out_specs=y_spec),
        compiler_params=cp2,
    )(y, a2, b2)

    # Channel-major already: the final reshape to NCHW is free metadata.
    return out.reshape(N, C_out, H_out, W_out)


# --------------------------------------------------------------------------- #
# Pure-JAX reference
# --------------------------------------------------------------------------- #
def _reference(x, w_dil, w_pw, gamma, beta, *, stride, padding, dilation, eps=1e-5):
    h = jax.nn.relu(x)
    h = jax.lax.conv_general_dilated(
        h, w_dil, (stride, stride), [(padding, padding), (padding, padding)],
        rhs_dilation=(dilation, dilation),
        dimension_numbers=('NCHW', 'OIHW', 'NCHW'),
        precision=jax.lax.Precision.HIGHEST)
    h = jax.lax.conv_general_dilated(
        h, w_pw, (1, 1), [(0, 0), (0, 0)],
        dimension_numbers=('NCHW', 'OIHW', 'NCHW'),
        precision=jax.lax.Precision.HIGHEST)
    mean = h.mean(axis=(0, 2, 3), keepdims=True)
    var = h.var(axis=(0, 2, 3), keepdims=True)
    return ((h - mean) * jax.lax.rsqrt(var + eps)
            * gamma[None, :, None, None] + beta[None, :, None, None])


if __name__ == "__main__":
    # DilConv(C_in=4, C_out=8, kernel_size=3, stride=1, padding=2, dilation=2)
    N, C_in, C_out, H, W = 2, 4, 8, 16, 16
    K, stride, padding, dilation = 3, 1, 2, 2

    key = jax.random.PRNGKey(0)
    k1, k2, k3, k4, k5 = jax.random.split(key, 5)
    x = jax.random.normal(k1, (N, C_in, H, W), dtype=jnp.float32)
    w_dil = 0.1 * jax.random.normal(k2, (C_in, C_in, K, K), dtype=jnp.float32)
    w_pw = 0.1 * jax.random.normal(k3, (C_out, C_in, 1, 1), dtype=jnp.float32)
    gamma = 1.0 + 0.1 * jax.random.normal(k4, (C_out,), dtype=jnp.float32)
    beta = 0.1 * jax.random.normal(k5, (C_out,), dtype=jnp.float32)

    run = jax.jit(functools.partial(dil_conv, stride=stride, padding=padding,
                                    dilation=dilation))
    out = jax.block_until_ready(run(x, w_dil, w_pw, gamma, beta))

    ref = _reference(x, w_dil, w_pw, gamma, beta,
                     stride=stride, padding=padding, dilation=dilation)
    assert out.shape == ref.shape == (N, C_out, H, W)
    err = float(jnp.max(jnp.abs(out - ref)))
    assert jnp.allclose(out, ref, rtol=2e-2, atol=2e-2), f"max abs err {err}"

    print("KERNEL_OK")
</pallas_src>

<mosaic_0001>
module attributes {stable_mosaic.version = 11 : i64} {
  func.func @_conv_stats_kernel(%arg0: i32, %arg1: memref<1x12x320xf32, #tpu.memory_space<vmem>>, %arg2: memref<8x36xf32, #tpu.memory_space<vmem>>, %arg3: memref<1x8x256xf32, #tpu.memory_space<vmem>>, %arg4: memref<1x8x2xf32, #tpu.memory_space<vmem>>, %arg5: memref<36x256xf32, #tpu.memory_space<vmem>>) attributes {dimension_semantics = [#tpu.dimension_semantics<parallel>], iteration_bounds = array<i64: 2>, scalar_prefetch = 0 : i64, scratch_operands = 1 : i64, tpu.core_type = #tpu.core_type<tc>, window_params = [{transform_indices = @transform_0, window_bounds = array<i64: 1, 12, 320>}, {pipeline_mode = #tpu.pipeline_mode<synchronous>, transform_indices = @transform_1, window_bounds = array<i64: 8, 36>}, {transform_indices = @transform_2, window_bounds = array<i64: 1, 8, 256>}, {transform_indices = @transform_3, window_bounds = array<i64: 1, 8, 2>}]} {
    %cst = arith.constant 0.000000e+00 : f32
    %0 = vector.broadcast %cst : f32 to vector<8x1xf32>
    %cst_0 = arith.constant 0.000000e+00 : f32
    %1 = vector.broadcast %cst_0 : f32 to vector<8x1xf32>
    %c0 = arith.constant 0 : index
    %c0_1 = arith.constant 0 : index
    %c0_2 = arith.constant 0 : index
    %2 = vector.load %arg1[%c0, %c0_1, %c0_2] : memref<1x12x320xf32, #tpu.memory_space<vmem>>, vector<1x12x256xf32>
    %3 = vector.shape_cast %2 : vector<1x12x256xf32> to vector<12x256xf32>
    %cst_3 = arith.constant 0.000000e+00 : f32
    %4 = vector.broadcast %cst_3 : f32 to vector<12x256xf32>
    %5 = arith.maximumf %3, %4 : vector<12x256xf32>
    %c0_4 = arith.constant 0 : index
    %c0_5 = arith.constant 0 : index
    %6 = vector.load %arg5[%c0_4, %c0_5] : memref<36x256xf32, #tpu.memory_space<vmem>>, vector<12x256xf32>
    tpu.vector_store %arg5[%c0_4, %c0_5], %5 {strides = array<i32>} : memref<36x256xf32, #tpu.memory_space<vmem>>, vector<12x256xf32>,
    %c0_6 = arith.constant 0 : index
    %c0_7 = arith.constant 0 : index
    %c32 = arith.constant 32 : index
    %7 = vector.load %arg1[%c0_6, %c0_7, %c32] : memref<1x12x320xf32, #tpu.memory_space<vmem>>, vector<1x12x256xf32>
    %8 = vector.shape_cast %7 : vector<1x12x256xf32> to vector<12x256xf32>
    %cst_8 = arith.constant 0.000000e+00 : f32
    %9 = vector.broadcast %cst_8 : f32 to vector<12x256xf32>
    %10 = arith.maximumf %8, %9 : vector<12x256xf32>
    %c12 = arith.constant 12 : index
    %c0_9 = arith.constant 0 : index
    %11 = vector.load %arg5[%c12, %c0_9] : memref<36x256xf32, #tpu.memory_space<vmem>>, vector<12x256xf32>
    tpu.vector_store %arg5[%c12, %c0_9], %10 {strides = array<i32>} : memref<36x256xf32, #tpu.memory_space<vmem>>, vector<12x256xf32>,
    %c0_10 = arith.constant 0 : index
    %c0_11 = arith.constant 0 : index
    %c64 = arith.constant 64 : index
    %12 = vector.load %arg1[%c0_10, %c0_11, %c64] : memref<1x12x320xf32, #tpu.memory_space<vmem>>, vector<1x12x256xf32>
    %13 = vector.shape_cast %12 : vector<1x12x256xf32> to vector<12x256xf32>
    %cst_12 = arith.constant 0.000000e+00 : f32
    %14 = vector.broadcast %cst_12 : f32 to vector<12x256xf32>
    %15 = arith.maximumf %13, %14 : vector<12x256xf32>
    %c24 = arith.constant 24 : index
    %c0_13 = arith.constant 0 : index
    %16 = vector.load %arg5[%c24, %c0_13] : memref<36x256xf32, #tpu.memory_space<vmem>>, vector<12x256xf32>
    tpu.vector_store %arg5[%c24, %c0_13], %15 {strides = array<i32>} : memref<36x256xf32, #tpu.memory_space<vmem>>, vector<12x256xf32>,
    %c0_14 = arith.constant 0 : index
    %c0_15 = arith.constant 0 : index
    %17 = vector.load %arg5[%c0_14, %c0_15] : memref<36x256xf32, #tpu.memory_space<vmem>>, vector<36x256xf32>
    %c0_16 = arith.constant 0 : index
    %c0_17 = arith.constant 0 : index
    %18 = vector.load %arg2[%c0_16, %c0_17] : memref<8x36xf32, #tpu.memory_space<vmem>>, vector<8x36xf32>
    %cst_18 = arith.constant dense<0.000000e+00> : vector<8x256xf32>
    %19 = tpu.matmul %18, %17, %cst_18 {dimension_numbers = #tpu.dot_dimension_numbers<[1], [0], [0], [1], [0, 0, 1, 1], [], []>} : vector<8x36xf32>, vector<36x256xf32>, vector<8x256xf32> -> vector<8x256xf32>
    %c0_19 = arith.constant 0 : index
    %c0_20 = arith.constant 0 : index
    %c0_21 = arith.constant 0 : index
    %20 = vector.load %arg3[%c0_19, %c0_20, %c0_21] : memref<1x8x256xf32, #tpu.memory_space<vmem>>, vector<1x8x256xf32>
    %21 = vector.shape_cast %20 : vector<1x8x256xf32> to vector<8x256xf32>
    %22 = vector.shape_cast %19 : vector<8x256xf32> to vector<1x8x256xf32>
    tpu.vector_store %arg3[%c0_19, %c0_20, %c0_21], %22 {strides = array<i32>} : memref<1x8x256xf32, #tpu.memory_space<vmem>>, vector<1x8x256xf32>,
    %cst_22 = arith.constant dense<0.000000e+00> : vector<8xf32>
    %23 = vector.multi_reduction <add>, %19, %cst_22 [1] : vector<8x256xf32> to vector<8xf32>
    %24 = vector.shape_cast %23 : vector<8xf32> to vector<8x1xf32>
    %25 = arith.addf %0, %24 : vector<8x1xf32>
    %26 = arith.mulf %19, %19 : vector<8x256xf32>
    %cst_23 = arith.constant dense<0.000000e+00> : vector<8xf32>
    %27 = vector.multi_reduction <add>, %26, %cst_23 [1] : vector<8x256xf32> to vector<8xf32>
    %28 = vector.shape_cast %27 : vector<8xf32> to vector<8x1xf32>
    %29 = arith.addf %1, %28 : vector<8x1xf32>
    %c0_24 = arith.constant 0 : index
    %c0_25 = arith.constant 0 : index
    %c0_26 = arith.constant 0 : index
    %30 = vector.load %arg4[%c0_24, %c0_25, %c0_26] : memref<1x8x2xf32, #tpu.memory_space<vmem>>, vector<1x8x1xf32>
    %31 = vector.shape_cast %30 : vector<1x8x1xf32> to vector<8x1xf32>
    %32 = vector.shape_cast %25 : vector<8x1xf32> to vector<1x8x1xf32>
    tpu.vector_store %arg4[%c0_24, %c0_25, %c0_26], %32 {strides = array<i32>} : memref<1x8x2xf32, #tpu.memory_space<vmem>>, vector<1x8x1xf32>,
    %c0_27 = arith.constant 0 : index
    %c0_28 = arith.constant 0 : index
    %c1 = arith.constant 1 : index
    %33 = vector.load %arg4[%c0_27, %c0_28, %c1] : memref<1x8x2xf32, #tpu.memory_space<vmem>>, vector<1x8x1xf32>
    %34 = vector.shape_cast %33 : vector<1x8x1xf32> to vector<8x1xf32>
    %35 = vector.shape_cast %29 : vector<8x1xf32> to vector<1x8x1xf32>
    tpu.vector_store %arg4[%c0_27, %c0_28, %c1], %35 {strides = array<i32>} : memref<1x8x2xf32, #tpu.memory_space<vmem>>, vector<1x8x1xf32>,
    return
  }
  func.func @transform_0(%arg0: i32) -> (i32, i32, i32) {
    %c0_i32 = arith.constant 0 : i32
    %c0_i32_0 = arith.constant 0 : i32
    %c0_i32_1 = arith.constant 0 : i32
    return %arg0, %c0_i32, %c0_i32_0 : i32, i32, i32
  }
  func.func @transform_1(%arg0: i32) -> (i32, i32) {
    %c0_i32 = arith.constant 0 : i32
    %c0_i32_0 = arith.constant 0 : i32
    %c0_i32_1 = arith.constant 0 : i32
    return %c0_i32, %c0_i32_0 : i32, i32
  }
  func.func @transform_2(%arg0: i32) -> (i32, i32, i32) {
    %c0_i32 = arith.constant 0 : i32
    %c0_i32_0 = arith.constant 0 : i32
    %c0_i32_1 = arith.constant 0 : i32
    return %arg0, %c0_i32, %c0_i32_0 : i32, i32, i32
  }
  func.func @transform_3(%arg0: i32) -> (i32, i32, i32) {
    %c0_i32 = arith.constant 0 : i32
    %c0_i32_0 = arith.constant 0 : i32
    %c0_i32_1 = arith.constant 0 : i32
    return %arg0, %c0_i32, %c0_i32_0 : i32, i32, i32
  }
}

module attributes {stable_mosaic.version = 11 : i64} {
  func.func @_bn_apply_kernel(%arg0: i32, %arg1: memref<1x8x256xf32, #tpu.memory_space<vmem>>, %arg2: memref<8x1xf32, #tpu.memory_space<vmem>>, %arg3: memref<8x1xf32, #tpu.memory_space<vmem>>, %arg4: memref<1x8x256xf32, #tpu.memory_space<vmem>>) attributes {dimension_semantics = [#tpu.dimension_semantics<parallel>], iteration_bounds = array<i64: 2>, scalar_prefetch = 0 : i64, scratch_operands = 0 : i64, tpu.core_type = #tpu.core_type<tc>, window_params = [{transform_indices = @transform_0, window_bounds = array<i64: 1, 8, 256>}, {pipeline_mode = #tpu.pipeline_mode<synchronous>, transform_indices = @transform_1, window_bounds = array<i64: 8, 1>}, {pipeline_mode = #tpu.pipeline_mode<synchronous>, transform_indices = @transform_2, window_bounds = array<i64: 8, 1>}, {transform_indices = @transform_3, window_bounds = array<i64: 1, 8, 256>}]} {
    %c0 = arith.constant 0 : index
    %c0_0 = arith.constant 0 : index
    %c0_1 = arith.constant 0 : index
    %0 = vector.load %arg1[%c0, %c0_0, %c0_1] : memref<1x8x256xf32, #tpu.memory_space<vmem>>, vector<1x8x256xf32>
    %c0_2 = arith.constant 0 : index
    %c0_3 = arith.constant 0 : index
    %1 = vector.load %arg2[%c0_2, %c0_3] : memref<8x1xf32, #tpu.memory_space<vmem>>, vector<8x1xf32>
    %2 = vector.shape_cast %1 : vector<8x1xf32> to vector<1x8x1xf32>
    %3 = vector.broadcast %2 : vector<1x8x1xf32> to vector<1x8x256xf32>
    %4 = arith.mulf %0, %3 : vector<1x8x256xf32>
    %c0_4 = arith.constant 0 : index
    %c0_5 = arith.constant 0 : index
    %5 = vector.load %arg3[%c0_4, %c0_5] : memref<8x1xf32, #tpu.memory_space<vmem>>, vector<8x1xf32>
    %6 = vector.shape_cast %5 : vector<8x1xf32> to vector<1x8x1xf32>
    %7 = vector.broadcast %6 : vector<1x8x1xf32> to vector<1x8x256xf32>
    %8 = arith.addf %4, %7 : vector<1x8x256xf32>
    %c0_6 = arith.constant 0 : index
    %c0_7 = arith.constant 0 : index
    %c0_8 = arith.constant 0 : index
    %9 = vector.load %arg4[%c0_6, %c0_7, %c0_8] : memref<1x8x256xf32, #tpu.memory_space<vmem>>, vector<1x8x256xf32>
    tpu.vector_store %arg4[%c0_6, %c0_7, %c0_8], %8 {strides = array<i32>} : memref<1x8x256xf32, #tpu.memory_space<vmem>>, vector<1x8x256xf32>,
    return
  }
  func.func @transform_0(%arg0: i32) -> (i32, i32, i32) {
    %c0_i32 = arith.constant 0 : i32
    %c0_i32_0 = arith.constant 0 : i32
    %c0_i32_1 = arith.constant 0 : i32
    return %arg0, %c0_i32, %c0_i32_0 : i32, i32, i32
  }
  func.func @transform_1(%arg0: i32) -> (i32, i32) {
    %c0_i32 = arith.constant 0 : i32
    %c0_i32_0 = arith.constant 0 : i32
    %c0_i32_1 = arith.constant 0 : i32
    return %c0_i32, %c0_i32_0 : i32, i32
  }
  func.func @transform_2(%arg0: i32) -> (i32, i32) {
    %c0_i32 = arith.constant 0 : i32
    %c0_i32_0 = arith.constant 0 : i32
    %c0_i32_1 = arith.constant 0 : i32
    return %c0_i32, %c0_i32_0 : i32, i32
  }
  func.func @transform_3(%arg0: i32) -> (i32, i32, i32) {
    %c0_i32 = arith.constant 0 : i32
    %c0_i32_0 = arith.constant 0 : i32
    %c0_i32_1 = arith.constant 0 : i32
    return %arg0, %c0_i32, %c0_i32_0 : i32, i32, i32
  }
}

</mosaic_0001>

<llo_original>
// kernel: dil_conv.3
$region0: #{dil_conv.3}
  #allocation0 [shape = 'u32[]', space=smem, size = 0x4, offset = 0x4, fixed_abs, tag = 'smem constant byte address 0x4 - core index']
  #allocation1 [shape = 'u32[72,128]{1,0:T(1,128)}', space=vmem, size = 0x9000, scoped, tag = 'internal scratch']
  %s0 = inlined_call_operand.vmem [shape: f32[2,8,256], index: 0, kind: input, shape index: {}]
  %s1 = inlined_call_operand.vmem [shape: f32[8,1], index: 1, kind: input, shape index: {}]
  %s2 = inlined_call_operand.vmem [shape: f32[8,1], index: 2, kind: input, shape index: {}]
  %s3 = inlined_call_operand.vmem [shape: f32[2,8,256], index: 3, kind: output, shape index: {}]
  %s4 = sld [smem:[#allocation0]]
  $region45: #{dil_conv.3} parent=0
    _
  %s6 = ssub.s32 1, %s4
  %s7 = scalar_select 0, %s6, %s4
  loop: start=0, step=1, limit=4
  $region2: #{dil_conv.3} parent=0 // loop_pre_header
    _
  $region3: #{dil_conv.3} parent=0 // loop_header
    %s9 = sphi 0, %s13
    %p10 = scmp.ge.s32.totalorder %s9, 4
    %s19 = sphi 0, %s21
    %s22 = sphi 0, %s19
    %s23 = sphi 0, %s22
    %s39 = sphi 0, %s23
    %s43 = sphi 0, %s43
    %s45 = sphi 0, %s43
    %s46 = sphi 0, %s45
    %s60 = sphi 0, %s46
    %s64 = sphi 0, %s64
    %s66 = sphi 0, %s64
    %s67 = sphi 0, %s66
    %s81 = sphi 0, %s67
    %s87 = sphi 0, %s89
    %s90 = sphi 0, %s87
    %s91 = sphi 0, %s90
    %s107 = sphi 0, %s91
  $region4: #{dil_conv.3} parent=0 // loop_header_branch
    %12 = sbr.rel (%p10) target = $region8
  $region5: #{dil_conv.3} parent=0 // loop_body
    %s14 = ssub.s32 %s9, 1
    %s15 = ssub.s32 %s9, 2
    %s16 = sadd.s32 %s9, 1
    %s17 = ssub.s32 %s9, %s16
    %p18 = scmp.eq.s32.totalorder %s17, 0
    %s20 = sadd.s32 %s19, 1
    %s21 = scalar_select %p18, %s19, %s20
    %p24 = pneg %p18
    %p25 = scmp.eq.s32.totalorder %s9, 1
    %p26 = por %p24, %p25
    %p27 = scmp.ne.s32.totalorder %s19, %s22
    %p28 = scmp.eq.s32.totalorder %s9, 0
    %p29 = por %p27, %p28
    %p30 = scmp.ne.s32.totalorder %s19, %s22
    %p31 = scmp.eq.s32.totalorder %s14, 1
    %p32 = por %p30, %p31
    %p33 = scmp.ne.s32.totalorder %s22, %s23
    %p34 = scmp.eq.s32.totalorder %s14, 0
    %p35 = por %p33, %p34
    %p36 = scmp.ne.s32.totalorder %s22, %s23
    %p37 = scmp.eq.s32.totalorder %s15, 1
    %p38 = por %p36, %p37
    %p40 = scmp.ne.s32.totalorder %s23, %s39
    %p41 = scmp.eq.s32.totalorder %s15, 0
    %p42 = por %p40, %p41
    %s44 = sadd.s32 %s43, 1
    %p47 = scmp.eq.s32.totalorder %s9, 1
    %p48 = scmp.ne.s32.totalorder %s43, %s45
    %p49 = scmp.eq.s32.totalorder %s9, 0
    %p50 = por %p48, %p49
    %p51 = scmp.ne.s32.totalorder %s43, %s45
    %p52 = scmp.eq.s32.totalorder %s14, 1
    %p53 = por %p51, %p52
    %p54 = scmp.ne.s32.totalorder %s45, %s46
    %p55 = scmp.eq.s32.totalorder %s14, 0
    %p56 = por %p54, %p55
    %p57 = scmp.ne.s32.totalorder %s45, %s46
    %p58 = scmp.eq.s32.totalorder %s15, 1
    %p59 = por %p57, %p58
    %p61 = scmp.ne.s32.totalorder %s46, %s60
    %p62 = scmp.eq.s32.totalorder %s15, 0
    %p63 = por %p61, %p62
    %s65 = sadd.s32 %s64, 1
    %p68 = scmp.eq.s32.totalorder %s9, 1
    %p69 = scmp.ne.s32.totalorder %s64, %s66
    %p70 = scmp.eq.s32.totalorder %s9, 0
    %p71 = por %p69, %p70
    %p72 = scmp.ne.s32.totalorder %s64, %s66
    %p73 = scmp.eq.s32.totalorder %s14, 1
    %p74 = por %p72, %p73
    %p75 = scmp.ne.s32.totalorder %s66, %s67
    %p76 = scmp.eq.s32.totalorder %s14, 0
    %p77 = por %p75, %p76
    %p78 = scmp.ne.s32.totalorder %s66, %s67
    %p79 = scmp.eq.s32.totalorder %s15, 1
    %p80 = por %p78, %p79
    %p82 = scmp.ne.s32.totalorder %s67, %s81
    %p83 = scmp.eq.s32.totalorder %s15, 0
    %p84 = por %p82, %p83
    %s85 = ssub.s32 %s9, %s16
    %p86 = scmp.eq.s32.totalorder %s85, 0
    %s88 = sadd.s32 %s87, 1
    %s89 = scalar_select %p86, %s87, %s88
    %p92 = pneg %p86
    %p93 = scmp.eq.s32.totalorder %s9, 1
    %p94 = por %p92, %p93
    %p95 = scmp.ne.s32.totalorder %s87, %s90
    %p96 = scmp.eq.s32.totalorder %s9, 0
    %p97 = por %p95, %p96
    %p98 = scmp.ne.s32.totalorder %s87, %s90
    %p99 = scmp.eq.s32.totalorder %s14, 1
    %p100 = por %p98, %p99
    %p101 = scmp.ne.s32.totalorder %s90, %s91
    %p102 = scmp.eq.s32.totalorder %s14, 0
    %p103 = por %p101, %p102
    %p104 = scmp.ne.s32.totalorder %s90, %s91
    %p105 = scmp.eq.s32.totalorder %s15, 1
    %p106 = por %p104, %p105
    %p108 = scmp.ne.s32.totalorder %s91, %s107
    %p109 = scmp.eq.s32.totalorder %s15, 0
    %p110 = por %p108, %p109
    %p111 = scmp.le.s32.totalorder 1, %s9
    %p112 = scmp.lt.s32.totalorder %s9, 3
    %p113 = pnand %p111, %p112
    %p114 = pneg %p113
    // Predicated region
    $region9: #{dil_conv.3} parent=5 // pred_check
      _
    $region10: #{dil_conv.3} parent=5 // pred_check_branch
      %116 = sbr.rel (%p113) target = $region12
    $region11: #{dil_conv.3} parent=5 // pred_region
      %s117 = ssub.s32 %s9, 1
      // Predicated region
      $region13: #{dil_conv.3} parent=11 // pred_check
        %p118 = pneg %p56
      $region14: #{dil_conv.3} parent=11 // pred_check_branch
        %120 = sbr.rel (%p118) target = $region16
      $region15: #{dil_conv.3} parent=11 // pred_region
        _
      $region16: #{dil_conv.3} parent=11 // pred_fallthru
        _
      // Predicated region
      $region17: #{dil_conv.3} parent=11 // pred_check
        %p121 = pneg %p77
      $region18: #{dil_conv.3} parent=11 // pred_check_branch
        %123 = sbr.rel (%p121) target = $region20
      $region19: #{dil_conv.3} parent=11 // pred_region
        _
      $region20: #{dil_conv.3} parent=11 // pred_fallthru
        _
    $region12: #{dil_conv.3} parent=5 // pred_fallthru
      _
    %p124 = scmp.lt.s32.totalorder %s9, 2
    // Predicated region
    $region21: #{dil_conv.3} parent=5 // pred_check
      %p125 = pneg %p124
    $region22: #{dil_conv.3} parent=5 // pred_check_branch
      %127 = sbr.rel (%p125) target = $region24
    $region23: #{dil_conv.3} parent=5 // pred_region
      // Predicated region
      $region25: #{dil_conv.3} parent=23 // pred_check
        %p128 = pneg %p29
      $region26: #{dil_conv.3} parent=23 // pred_check_branch
        %130 = sbr.rel (%p128) target = $region28
      $region27: #{dil_conv.3} parent=23 // pred_region
        %p131 = scmp.lt.s32.totalorder %s9, 1
        %s132 = scalar_select %p131, %s9, 1
        %s133 = smul.addr %s132, 2
        %s134 = smul.addr %s133, 8
        %s135 = scalar_lea.vmem %s0, %s134
      $region28: #{dil_conv.3} parent=23 // pred_fallthru
        _
    $region24: #{dil_conv.3} parent=5 // pred_fallthru
      _
    %p136 = scmp.le.s32.totalorder 1, %s9
    %p137 = scmp.lt.s32.totalorder %s9, 3
    %p138 = pnand %p136, %p137
    %p139 = pneg %p138
    // Predicated region
    $region29: #{dil_conv.3} parent=5 // pred_check
      _
    $region30: #{dil_conv.3} parent=5 // pred_check_branch
      %141 = sbr.rel (%p138) target = $region32
    $region31: #{dil_conv.3} parent=5 // pred_region
      %s142 = ssub.s32 %s9, 1
      %p143 = scmp.lt.s32.totalorder %s14, 1
      %s144 = scalar_select %p143, %s14, 1
      %s145 = smul.addr %s144, 2
      %s146 = smul.addr %s145, 8
      %s147 = scalar_lea.vmem %s0, %s146
      %p148 = pneg %p35
      %p149 = pneg %p32
      %p150 = pneg %p56
      %p151 = pneg %p53
      %p152 = pneg %p77
      %p153 = pneg %p74
      %p154 = pneg %p103
      %p155 = pneg %p100
      %p156 = scmp.lt.s32.totalorder %s14, 1
      %s157 = scalar_select %p156, %s14, 1
      %s158 = smul.addr %s157, 2
      %s159 = smul.addr %s158, 8
      %s160 = scalar_lea.vmem %s3, %s159
      %p161 = scmp.lt.s32.totalorder %s14, 1
      %s162 = scalar_select %p161, %s14, 1
      %s163 = smul.addr %s162, 2
      %s164 = smul.addr %s163, 8
      %s165 = scalar_lea.vmem %s0, %s164
      %p166 = scmp.lt.s32.totalorder %s14, 1
      %s167 = scalar_select %p166, %s14, 1
      %s168 = smul.addr %s167, 2
      %s169 = smul.addr %s168, 8
      %s170 = scalar_lea.vmem %s3, %s169
      %v171 = vld [vmem:[%s165] sm:$0xff]
      %v172 = vld [vmem:[%s165 + $0x8] sm:$0xff]
      %v173 = vld [vmem:[%s1] sm:$0xff]
      %175 = vset.pattern.permute.xlu0 0
      %176 = vperm.xlu0 %175, %v173
      %v177 = vpop.permute.xlu0 %176
      %v179 = vmul.f32 %v171, %v177
      %v180 = vmul.f32 %v172, %v177
      %v181 = vld [vmem:[%s2] sm:$0xff]
      %183 = vset.pattern.permute.xlu0 0
      %184 = vperm.xlu0 %183, %v181
      %v185 = vpop.permute.xlu0 %184
      %v187 = vadd.f32 %v179, %v185
      %v188 = vadd.f32 %v180, %v185
      %189 = vst [vmem:[%s170] sm:$0xff] %v187
      %190 = vst [vmem:[%s170 + $0x8] sm:$0xff] %v188
      %p191 = scmp.lt.s32.totalorder %s14, 1
      %s192 = scalar_select %p191, %s14, 1
      %s193 = smul.addr %s192, 2
      %s194 = smul.addr %s193, 8
      %s195 = scalar_lea.vmem %s3, %s194
      // Predicated region
      $region33: #{dil_conv.3} parent=31 // pred_check
        %p196 = pneg %p100
      $region34: #{dil_conv.3} parent=31 // pred_check_branch
        %198 = sbr.rel (%p196) target = $region36
      $region35: #{dil_conv.3} parent=31 // pred_region
        _
      $region36: #{dil_conv.3} parent=31 // pred_fallthru
        _
    $region32: #{dil_conv.3} parent=5 // pred_fallthru
      _
    %p199 = scmp.le.s32.totalorder 2, %s9
    // Predicated region
    $region37: #{dil_conv.3} parent=5 // pred_check
      %p200 = pneg %p199
    $region38: #{dil_conv.3} parent=5 // pred_check_branch
      %202 = sbr.rel (%p200) target = $region40
    $region39: #{dil_conv.3} parent=5 // pred_region
      %s203 = ssub.s32 %s9, 2
      // Predicated region
      $region41: #{dil_conv.3} parent=39 // pred_check
        %p204 = pneg %p106
      $region42: #{dil_conv.3} parent=39 // pred_check_branch
        %206 = sbr.rel (%p204) target = $region44
      $region43: #{dil_conv.3} parent=39 // pred_region
        %p207 = scmp.lt.s32.totalorder %s15, 1
        %s208 = scalar_select %p207, %s15, 1
        %s209 = smul.addr %s208, 2
        %s210 = smul.addr %s209, 8
        %s211 = scalar_lea.vmem %s3, %s210
      $region44: #{dil_conv.3} parent=39 // pred_fallthru
        _
    $region40: #{dil_conv.3} parent=5 // pred_fallthru
      _
  $region6: #{dil_conv.3} parent=0 // loop_footer
    %s13 = sadd.s32 1, %s9
  $region7: #{dil_conv.3} parent=0 // loop_footer_branch
    %8 = sbr.rel target = $region3
  $region8: #{dil_conv.3} parent=0 // loop_exit
    _

// kernel: dil_conv.2
$region0: #{dil_conv.2}
  #allocation0 [shape = 'u32[]', space=smem, size = 0x4, offset = 0x4, fixed_abs, tag = 'smem constant byte address 0x4 - core index']
  #allocation1 [shape = 'u32[72,128]{1,0:T(1,128)}', space=vmem, size = 0x9000, scoped, tag = 'internal scratch']
  #allocation2 [shape = 'f32[36,256]{1,0:T(8,128)}', space=vmem, size = 0xa000, scoped, tag = 'scratch operand']
  %s0 = inlined_call_operand.vmem [shape: f32[2,12,320], index: 0, kind: input, shape index: {}]
  %s1 = inlined_call_operand.vmem [shape: f32[8,36], index: 1, kind: input, shape index: {}]
  %s2 = inlined_call_operand.vmem [shape: f32[2,8,256], index: 2, kind: output, shape index: {0}]
  %s3 = inlined_call_operand.vmem [shape: f32[2,8,2], index: 3, kind: output, shape index: {1}]
  %4 = xla_tuple %s2, %s3
  %s5 = sld [smem:[#allocation0]]
  $region49: #{dil_conv.2} parent=0
    _
  %s7 = ssub.s32 1, %s5
  %s8 = scalar_select 0, %s7, %s5
  loop: start=0, step=1, limit=4
  $region2: #{dil_conv.2} parent=0 // loop_pre_header
    _
  $region3: #{dil_conv.2} parent=0 // loop_header
    %s10 = sphi 0, %s14
    %p11 = scmp.ge.s32.totalorder %s10, 4
    %s20 = sphi 0, %s22
    %s23 = sphi 0, %s20
    %s24 = sphi 0, %s23
    %s40 = sphi 0, %s24
    %s44 = sphi 0, %s44
    %s46 = sphi 0, %s44
    %s47 = sphi 0, %s46
    %s61 = sphi 0, %s47
    %s67 = sphi 0, %s69
    %s70 = sphi 0, %s67
    %s71 = sphi 0, %s70
    %s87 = sphi 0, %s71
    %s93 = sphi 0, %s95
    %s96 = sphi 0, %s93
    %s97 = sphi 0, %s96
    %s113 = sphi 0, %s97
  $region4: #{dil_conv.2} parent=0 // loop_header_branch
    %13 = sbr.rel (%p11) target = $region8
  $region5: #{dil_conv.2} parent=0 // loop_body
    %s15 = ssub.s32 %s10, 1
    %s16 = ssub.s32 %s10, 2
    %s17 = sadd.s32 %s10, 1
    %s18 = ssub.s32 %s10, %s17
    %p19 = scmp.eq.s32.totalorder %s18, 0
    %s21 = sadd.s32 %s20, 1
    %s22 = scalar_select %p19, %s20, %s21
    %p25 = pneg %p19
    %p26 = scmp.eq.s32.totalorder %s10, 1
    %p27 = por %p25, %p26
    %p28 = scmp.ne.s32.totalorder %s20, %s23
    %p29 = scmp.eq.s32.totalorder %s10, 0
    %p30 = por %p28, %p29
    %p31 = scmp.ne.s32.totalorder %s20, %s23
    %p32 = scmp.eq.s32.totalorder %s15, 1
    %p33 = por %p31, %p32
    %p34 = scmp.ne.s32.totalorder %s23, %s24
    %p35 = scmp.eq.s32.totalorder %s15, 0
    %p36 = por %p34, %p35
    %p37 = scmp.ne.s32.totalorder %s23, %s24
    %p38 = scmp.eq.s32.totalorder %s16, 1
    %p39 = por %p37, %p38
    %p41 = scmp.ne.s32.totalorder %s24, %s40
    %p42 = scmp.eq.s32.totalorder %s16, 0
    %p43 = por %p41, %p42
    %s45 = sadd.s32 %s44, 1
    %p48 = scmp.eq.s32.totalorder %s10, 1
    %p49 = scmp.ne.s32.totalorder %s44, %s46
    %p50 = scmp.eq.s32.totalorder %s10, 0
    %p51 = por %p49, %p50
    %p52 = scmp.ne.s32.totalorder %s44, %s46
    %p53 = scmp.eq.s32.totalorder %s15, 1
    %p54 = por %p52, %p53
    %p55 = scmp.ne.s32.totalorder %s46, %s47
    %p56 = scmp.eq.s32.totalorder %s15, 0
    %p57 = por %p55, %p56
    %p58 = scmp.ne.s32.totalorder %s46, %s47
    %p59 = scmp.eq.s32.totalorder %s16, 1
    %p60 = por %p58, %p59
    %p62 = scmp.ne.s32.totalorder %s47, %s61
    %p63 = scmp.eq.s32.totalorder %s16, 0
    %p64 = por %p62, %p63
    %s65 = ssub.s32 %s10, %s17
    %p66 = scmp.eq.s32.totalorder %s65, 0
    %s68 = sadd.s32 %s67, 1
    %s69 = scalar_select %p66, %s67, %s68
    %p72 = pneg %p66
    %p73 = scmp.eq.s32.totalorder %s10, 1
    %p74 = por %p72, %p73
    %p75 = scmp.ne.s32.totalorder %s67, %s70
    %p76 = scmp.eq.s32.totalorder %s10, 0
    %p77 = por %p75, %p76
    %p78 = scmp.ne.s32.totalorder %s67, %s70
    %p79 = scmp.eq.s32.totalorder %s15, 1
    %p80 = por %p78, %p79
    %p81 = scmp.ne.s32.totalorder %s70, %s71
    %p82 = scmp.eq.s32.totalorder %s15, 0
    %p83 = por %p81, %p82
    %p84 = scmp.ne.s32.totalorder %s70, %s71
    %p85 = scmp.eq.s32.totalorder %s16, 1
    %p86 = por %p84, %p85
    %p88 = scmp.ne.s32.totalorder %s71, %s87
    %p89 = scmp.eq.s32.totalorder %s16, 0
    %p90 = por %p88, %p89
    %s91 = ssub.s32 %s10, %s17
    %p92 = scmp.eq.s32.totalorder %s91, 0
    %s94 = sadd.s32 %s93, 1
    %s95 = scalar_select %p92, %s93, %s94
    %p98 = pneg %p92
    %p99 = scmp.eq.s32.totalorder %s10, 1
    %p100 = por %p98, %p99
    %p101 = scmp.ne.s32.totalorder %s93, %s96
    %p102 = scmp.eq.s32.totalorder %s10, 0
    %p103 = por %p101, %p102
    %p104 = scmp.ne.s32.totalorder %s93, %s96
    %p105 = scmp.eq.s32.totalorder %s15, 1
    %p106 = por %p104, %p105
    %p107 = scmp.ne.s32.totalorder %s96, %s97
    %p108 = scmp.eq.s32.totalorder %s15, 0
    %p109 = por %p107, %p108
    %p110 = scmp.ne.s32.totalorder %s96, %s97
    %p111 = scmp.eq.s32.totalorder %s16, 1
    %p112 = por %p110, %p111
    %p114 = scmp.ne.s32.totalorder %s97, %s113
    %p115 = scmp.eq.s32.totalorder %s16, 0
    %p116 = por %p114, %p115
    %p117 = scmp.le.s32.totalorder 1, %s10
    %p118 = scmp.lt.s32.totalorder %s10, 3
    %p119 = pnand %p117, %p118
    %p120 = pneg %p119
    // Predicated region
    $region9: #{dil_conv.2} parent=5 // pred_check
      _
    $region10: #{dil_conv.2} parent=5 // pred_check_branch
      %122 = sbr.rel (%p119) target = $region12
    $region11: #{dil_conv.2} parent=5 // pred_region
      %s123 = ssub.s32 %s10, 1
      // Predicated region
      $region13: #{dil_conv.2} parent=11 // pred_check
        %p124 = pneg %p57
      $region14: #{dil_conv.2} parent=11 // pred_check_branch
        %126 = sbr.rel (%p124) target = $region16
      $region15: #{dil_conv.2} parent=11 // pred_region
        _
      $region16: #{dil_conv.2} parent=11 // pred_fallthru
        _
    $region12: #{dil_conv.2} parent=5 // pred_fallthru
      _
    %p127 = scmp.lt.s32.totalorder %s10, 2
    // Predicated region
    $region17: #{dil_conv.2} parent=5 // pred_check
      %p128 = pneg %p127
    $region18: #{dil_conv.2} parent=5 // pred_check_branch
      %130 = sbr.rel (%p128) target = $region20
    $region19: #{dil_conv.2} parent=5 // pred_region
      // Predicated region
      $region21: #{dil_conv.2} parent=19 // pred_check
        %p131 = pneg %p30
      $region22: #{dil_conv.2} parent=19 // pred_check_branch
        %133 = sbr.rel (%p131) target = $region24
      $region23: #{dil_conv.2} parent=19 // pred_region
        %p134 = scmp.lt.s32.totalorder %s10, 1
        %s135 = scalar_select %p134, %s10, 1
        %s136 = smul.addr %s135, 6
        %s137 = smul.addr %s136, 8
        %s138 = scalar_lea.vmem %s0, %s137
      $region24: #{dil_conv.2} parent=19 // pred_fallthru
        _
    $region20: #{dil_conv.2} parent=5 // pred_fallthru
      _
    %p139 = scmp.le.s32.totalorder 1, %s10
    %p140 = scmp.lt.s32.totalorder %s10, 3
    %p141 = pnand %p139, %p140
    %p142 = pneg %p141
    // Predicated region
    $region25: #{dil_conv.2} parent=5 // pred_check
      _
    $region26: #{dil_conv.2} parent=5 // pred_check_branch
      %144 = sbr.rel (%p141) target = $region28
    $region27: #{dil_conv.2} parent=5 // pred_region
      %s145 = ssub.s32 %s10, 1
      %p146 = scmp.lt.s32.totalorder %s15, 1
      %s147 = scalar_select %p146, %s15, 1
      %s148 = smul.addr %s147, 6
      %s149 = smul.addr %s148, 8
      %s150 = scalar_lea.vmem %s0, %s149
      %p151 = pneg %p36
      %p152 = pneg %p33
      %p153 = pneg %p57
      %p154 = pneg %p54
      %p155 = pneg %p83
      %p156 = pneg %p80
      %p157 = scmp.lt.s32.totalorder %s15, 1
      %s158 = scalar_select %p157, %s15, 1
      %s159 = smul.addr %s158, 2
      %s160 = smul.addr %s159, 8
      %s161 = scalar_lea.vmem %s2, %s160
      %p162 = pneg %p109
      %p163 = pneg %p106
      %p164 = scmp.lt.s32.totalorder %s15, 1
      %s165 = scalar_select %p164, %s15, 1
      %s166 = smul.addr %s165, 8
      %s167 = scalar_lea.vmem %s3, %s166
      %p168 = scmp.lt.s32.totalorder %s15, 1
      %s169 = scalar_select %p168, %s15, 1
      %s170 = smul.addr %s169, 6
      %s171 = smul.addr %s170, 8
      %s172 = scalar_lea.vmem %s0, %s171
      %p173 = scmp.lt.s32.totalorder %s15, 1
      %s174 = scalar_select %p173, %s15, 1
      %s175 = smul.addr %s174, 2
      %s176 = smul.addr %s175, 8
      %s177 = scalar_lea.vmem %s2, %s176
      %p178 = scmp.lt.s32.totalorder %s15, 1
      %s179 = scalar_select %p178, %s15, 1
      %s180 = smul.addr %s179, 8
      %s181 = scalar_lea.vmem %s3, %s180
      %v182 = vld [vmem:[%s172] sm:$0xff]
      %v183 = vld [vmem:[%s172 + $0x8] sm:$0xff]
      %v184 = vld [vmem:[%s172 + $0x18] sm:$0xf]
      %v185 = vld [vmem:[%s172 + $0x20] sm:$0xf]
      %v186 = vmax.f32 %v182, 0.0
      %v187 = vmax.f32 %v183, 0.0
      %v188 = vmax.f32 %v184, 0.0
      %v189 = vmax.f32 %v185, 0.0
      %190 = vst [vmem:[#allocation2] sm:$0xff] %v186
      %191 = vst [vmem:[#allocation2 + $0x8] sm:$0xff] %v187
      %192 = vst [vmem:[#allocation2 + $0x10] sm:$0xf] %v188
      %193 = vst [vmem:[#allocation2 + $0x18] sm:$0xf] %v189
      %v194 = vld [vmem:[%s172] sm:$0xff]
      %v195 = vld [vmem:[%s172 + $0x8] sm:$0xff]
      %v196 = vld [vmem:[%s172 + $0x10] sm:$0xff]
      %v197 = vld [vmem:[%s172 + $0x18] sm:$0xf]
      %v198 = vld [vmem:[%s172 + $0x20] sm:$0xf]
      %v199 = vld [vmem:[%s172 + $0x28] sm:$0xf]
      %v200 = vmax.f32 %v194, 0.0
      %v201 = vmax.f32 %v195, 0.0
      %v202 = vmax.f32 %v196, 0.0
      %v203 = vmax.f32 %v197, 0.0
      %v204 = vmax.f32 %v198, 0.0
      %v205 = vmax.f32 %v199, 0.0
      %vm212 = vcmask 1043456
      %v213 = vrot.slane %v200, 4
      %v214 = vrot.slane %v201, 4
      %v215 = vrot.slane %v202, 4
      %v216 = vrot.slane %v203, 4
      %v217 = vsel %vm212, %v213, %v216
      %v218 = vrot.slane %v204, 4
      %v219 = vsel %vm212, %v214, %v218
      %v220 = vrot.slane %v205, 4
      %v221 = vsel %vm212, %v215, %v220
      %222 = vrot.lane.b32.xlu0 %v213, 96
      %v223 = vpop.permute.xlu0 %222
      %224 = vrot.lane.b32.xlu0 %v214, 96
      %v225 = vpop.permute.xlu0 %224
      %226 = vrot.lane.b32.xlu0 %v215, 96
      %v227 = vpop.permute.xlu0 %226
      %228 = vrot.lane.b32.xlu0 %v217, 96
      %v229 = vpop.permute.xlu0 %228
      %230 = vrot.lane.b32.xlu0 %v219, 96
      %v231 = vpop.permute.xlu0 %230
      %232 = vrot.lane.b32.xlu0 %v221, 96
      %v233 = vpop.permute.xlu0 %232
      %vm234 = vcmask 785408
      %v235 = vsel %vm234, %v223, %v225
      %v236 = vsel %vm234, %v225, %v227
      %v237 = vsel %vm234, %v229, %v231
      %v238 = vsel %vm234, %v231, %v233
      %243 = vst [vmem:[#allocation2 + $0x10] sm:$0xf0] %v235
      %244 = vst [vmem:[#allocation2 + $0x18] sm:$0xf0] %v236
      %245 = vst [vmem:[#allocation2 + $0x20] sm:$0xff] %v237
      %246 = vst [vmem:[#allocation2 + $0x28] sm:$0xff] %v238
      %v247 = vld [vmem:[%s172] sm:$0xff]
      %v248 = vld [vmem:[%s172 + $0x8] sm:$0xff]
      %v249 = vld [vmem:[%s172 + $0x10] sm:$0xff]
      %v250 = vld [vmem:[%s172 + $0x18] sm:$0xf]
      %v251 = vld [vmem:[%s172 + $0x20] sm:$0xf]
      %v252 = vld [vmem:[%s172 + $0x28] sm:$0xf]
      %v253 = vmax.f32 %v247, 0.0
      %v254 = vmax.f32 %v248, 0.0
      %v255 = vmax.f32 %v249, 0.0
      %v256 = vmax.f32 %v250, 0.0
      %v257 = vmax.f32 %v251, 0.0
      %v258 = vmax.f32 %v252, 0.0
      %265 = vrot.lane.b32.xlu0 %v253, 64
      %v266 = vpop.permute.xlu0 %265
      %267 = vrot.lane.b32.xlu0 %v254, 64
      %v268 = vpop.permute.xlu0 %267
      %269 = vrot.lane.b32.xlu0 %v255, 64
      %v270 = vpop.permute.xlu0 %269
      %271 = vrot.lane.b32.xlu0 %v256, 64
      %v272 = vpop.permute.xlu0 %271
      %273 = vrot.lane.b32.xlu0 %v257, 64
      %v274 = vpop.permute.xlu0 %273
      %275 = vrot.lane.b32.xlu0 %v258, 64
      %v276 = vpop.permute.xlu0 %275
      %vm277 = vcmask 523264
      %v278 = vsel %vm277, %v266, %v268
      %v279 = vsel %vm277, %v268, %v270
      %v280 = vsel %vm277, %v272, %v274
      %v281 = vsel %vm277, %v274, %v276
      %286 = vst [vmem:[#allocation2 + $0x30] sm:$0xff] %v278
      %287 = vst [vmem:[#allocation2 + $0x38] sm:$0xff] %v279
      %288 = vst [vmem:[#allocation2 + $0x40] sm:$0xf] %v280
      %289 = vst [vmem:[#allocation2 + $0x48] sm:$0xf] %v281
      %v290 = vld [vmem:[#allocation2] sm:$0xff]
      %v291 = vld [vmem:[#allocation2 + $0x8] sm:$0xff]
      %v292 = vld [vmem:[#allocation2 + $0x10] sm:$0xff]
      %v293 = vld [vmem:[#allocation2 + $0x18] sm:$0xff]
      %v294 = vld [vmem:[#allocation2 + $0x20] sm:$0xff]
      %v295 = vld [vmem:[#allocation2 + $0x28] sm:$0xff]
      %v296 = vld [vmem:[#allocation2 + $0x30] sm:$0xff]
      %v297 = vld [vmem:[#allocation2 + $0x38] sm:$0xff]
      %v298 = vld [vmem:[#allocation2 + $0x40] sm:$0xf]
      %v299 = vld [vmem:[#allocation2 + $0x48] sm:$0xf]
      %v300 = vld [vmem:[%s1] sm:$0xff]
      %vm301 = vcmask 293888
      %v303 = vsel %vm301, %v300, 0
      %v306 = vsel %vm212, %v298, 0
      %v309 = vsel %vm212, %v299, 0
      %311 = vmatpush.msra.mxu0 0.0
      %312 = vmatpush.msra.mxu0 0.0
      %313 = vmatpush.msra.mxu0 0.0
      %314 = vmatpush.msra.mxu0 0.0
      %315 = vmatpush.msra.mxu0 0.0
      %316 = vmatpush.msra.mxu0 0.0
      %317 = vmatpush.msra.mxu0 0.0
      %318 = vmatpush.msra.mxu0 0.0
      %319 = vmatpush.msra.mxu0 0.0
      %320 = vmatpush.msra.mxu0 0.0
      %321 = vmatpush.msra.mxu0 0.0
      %322 = vmatpush.msra.mxu0 %v306
      %323 = vmatpush.msra.mxu0 %v296
      %324 = vmatpush.msra.mxu0 %v294
      %325 = vmatpush.msra.mxu0 %v292
      %326 = vmatpush.msra.mxu0 %v290
      %327 = vmatmul.f32.gmra.mxu0 %v303
      %v328 = vpop.f32.mrf.mxu0
      %v329 = vadd.f32 0.0, %v328
      %330 = vdwg.mxu0
      %331 = vmatpush.msra.mxu0 0.0
      %332 = vmatpush.msra.mxu0 0.0
      %333 = vmatpush.msra.mxu0 0.0
      %334 = vmatpush.msra.mxu0 0.0
      %335 = vmatpush.msra.mxu0 0.0
      %336 = vmatpush.msra.mxu0 0.0
      %337 = vmatpush.msra.mxu0 0.0
      %338 = vmatpush.msra.mxu0 0.0
      %339 = vmatpush.msra.mxu0 0.0
      %340 = vmatpush.msra.mxu0 0.0
      %341 = vmatpush.msra.mxu0 0.0
      %342 = vmatpush.msra.mxu0 %v309
      %343 = vmatpush.msra.mxu0 %v297
      %344 = vmatpush.msra.mxu0 %v295
      %345 = vmatpush.msra.mxu0 %v293
      %346 = vmatpush.msra.mxu0 %v291
      %347 = vmatmul.f32.gmra.mxu0 %v303
      %v348 = vpop.f32.mrf.mxu0
      %v349 = vadd.f32 0.0, %v348
      %350 = vdwg.mxu0
      %351 = vst [vmem:[%s177] sm:$0xff] %v329
      %352 = vst [vmem:[%s177 + $0x8] sm:$0xff] %v349
      %v353 = vadd.f32 %v329, %v349
      %354 = vadd.xlane.f32.xlu0 %v353
      %v355 = vpop.xlane.xlu0 %354
      %v356 = vadd.f32 %v355, 0.0
      %v357 = vmul.f32 %v329, %v329
      %v358 = vmul.f32 %v349, %v349
      %v359 = vadd.f32 %v357, %v358
      %360 = vadd.xlane.f32.xlu0 %v359
      %v361 = vpop.xlane.xlu0 %360
      %v362 = vadd.f32 %v361, 0.0
      %vm363 = vcmask 7168
      %364 = vst.msk [vmem:[%s181] sm:$0xff] %vm363, %v356
      %vm365 = vcmask 15368
      %366 = vst.msk [vmem:[%s181] sm:$0xff] %vm365, %v362
      %p367 = scmp.lt.s32.totalorder %s15, 1
      %s368 = scalar_select %p367, %s15, 1
      %s369 = smul.addr %s368, 2
      %s370 = smul.addr %s369, 8
      %s371 = scalar_lea.vmem %s2, %s370
      %p372 = scmp.lt.s32.totalorder %s15, 1
      %s373 = scalar_select %p372, %s15, 1
      %s374 = smul.addr %s373, 8
      %s375 = scalar_lea.vmem %s3, %s374
      // Predicated region
      $region29: #{dil_conv.2} parent=27 // pred_check
        %p376 = pneg %p80
      $region30: #{dil_conv.2} parent=27 // pred_check_branch
        %378 = sbr.rel (%p376) target = $region32
      $region31: #{dil_conv.2} parent=27 // pred_region
        _
      $region32: #{dil_conv.2} parent=27 // pred_fallthru
        _
      // Predicated region
      $region33: #{dil_conv.2} parent=27 // pred_check
        %p379 = pneg %p106
      $region34: #{dil_conv.2} parent=27 // pred_check_branch
        %381 = sbr.rel (%p379) target = $region36
      $region35: #{dil_conv.2} parent=27 // pred_region
        _
      $region36: #{dil_conv.2} parent=27 // pred_fallthru
        _
    $region28: #{dil_conv.2} parent=5 // pred_fallthru
      _
    %p382 = scmp.le.s32.totalorder 2, %s10
    // Predicated region
    $region37: #{dil_conv.2} parent=5 // pred_check
      %p383 = pneg %p382
    $region38: #{dil_conv.2} parent=5 // pred_check_branch
      %385 = sbr.rel (%p383) target = $region40
    $region39: #{dil_conv.2} parent=5 // pred_region
      %s386 = ssub.s32 %s10, 2
      // Predicated region
      $region41: #{dil_conv.2} parent=39 // pred_check
        %p387 = pneg %p86
      $region42: #{dil_conv.2} parent=39 // pred_check_branch
        %389 = sbr.rel (%p387) target = $region44
      $region43: #{dil_conv.2} parent=39 // pred_region
        %p390 = scmp.lt.s32.totalorder %s16, 1
        %s391 = scalar_select %p390, %s16, 1
        %s392 = smul.addr %s391, 2
        %s393 = smul.addr %s392, 8
        %s394 = scalar_lea.vmem %s2, %s393
      $region44: #{dil_conv.2} parent=39 // pred_fallthru
        _
      // Predicated region
      $region45: #{dil_conv.2} parent=39 // pred_check
        %p395 = pneg %p112
      $region46: #{dil_conv.2} parent=39 // pred_check_branch
        %397 = sbr.rel (%p395) target = $region48
      $region47: #{dil_conv.2} parent=39 // pred_region
        %p398 = scmp.lt.s32.totalorder %s16, 1
        %s399 = scalar_select %p398, %s16, 1
        %s400 = smul.addr %s399, 8
        %s401 = scalar_lea.vmem %s3, %s400
      $region48: #{dil_conv.2} parent=39 // pred_fallthru
        _
    $region40: #{dil_conv.2} parent=5 // pred_fallthru
      _
  $region6: #{dil_conv.2} parent=0 // loop_footer
    %s14 = sadd.s32 1, %s10
  $region7: #{dil_conv.2} parent=0 // loop_footer_branch
    %9 = sbr.rel target = $region3
  $region8: #{dil_conv.2} parent=0 // loop_exit
    _

</llo_original>
